<compile_context>
chip_gen: v7x
topology: tpu7x:2x2x1
jax: 0.10.0
libtpu: 0.0.40
codegen_flags: <defaults>
</compile_context>

<pallas_src>
import jax
import jax.numpy as jnp
from jax.experimental import pallas as pl
from jax.experimental.pallas import tpu as pltpu


def _round_up(n, m):
    return (n + m - 1) // m * m


# ---------------------------------------------------------------------------
# Kernels
# ---------------------------------------------------------------------------

def _select_kernel_direct(x_ref, s_ref, o_ref):
    """Single default-precision pass: exact for bf16 / low-precision inputs."""
    o_ref[...] = jnp.dot(
        x_ref[...], s_ref[...], preferred_element_type=jnp.float32
    ).astype(o_ref.dtype)


def _select_kernel_f32_x3(x_ref, s_ref, o_ref):
    """f32 one-hot selection via a manual 3-piece bf16 split (X3 algorithm).

    x = hi + mid + lo with each piece bf16; S is an exact 0/1 bf16 matrix, so
    three default-precision bf16 MXU passes with f32 accumulation reconstruct
    x[:, mask] (up to subnormal / last-ulp corner cases) at half the MXU cost
    of Precision.HIGHEST (6 passes).
    """
    x = x_ref[...]
    s = s_ref[...]
    hi = x.astype(jnp.bfloat16)
    r1 = x - hi.astype(jnp.float32)
    mid = r1.astype(jnp.bfloat16)
    lo = (r1 - mid.astype(jnp.float32)).astype(jnp.bfloat16)
    acc = jnp.dot(hi, s, preferred_element_type=jnp.float32)
    acc = acc + jnp.dot(mid, s, preferred_element_type=jnp.float32)
    acc = acc + jnp.dot(lo, s, preferred_element_type=jnp.float32)
    o_ref[...] = acc.astype(o_ref.dtype)


# ---------------------------------------------------------------------------
# Wrapper
# ---------------------------------------------------------------------------

def _sublane_multiple(dtype):
    # f32 -> 8, bf16/f16 -> 16, int8/fp8 -> 32 (sub-32-bit dtypes pack sublanes).
    return {4: 8, 2: 16, 1: 32}.get(jnp.dtype(dtype).itemsize, 8)


def _pick_batch_tile(b, c, k_pad, dtype):
    """Batch tile rows: sublane-aligned, VMEM-budgeted, >=2 grid steps."""
    itemsize = jnp.dtype(dtype).itemsize
    sub = _sublane_multiple(dtype)
    # Double-buffered x tile + out tile; the f32 path also keeps the bf16
    # split pieces / residual live alongside x.
    per_row = 2 * (c + k_pad) * itemsize
    if jnp.dtype(dtype) == jnp.dtype(jnp.float32):
        per_row += 10 * c
    budget = 12 << 20  # stays under the smallest default scoped VMEM (v5e: 16 MiB)
    cap = max(sub, min(2048, (budget // per_row) // sub * sub))
    # >= 2 grid steps whenever the batch allows it (v7x megacore sharding);
    # otherwise the largest tile the budget allows (amortizes ~0.35us/step).
    tb = max(sub, min(cap, _round_up(pl.cdiv(b, 2), sub)))
    return tb


def _build_selection_matrix(mask, num_classes, x_dtype):
    """One-hot (C, K_pad) selection matrix; column j selects class mask[j]."""
    mask = jnp.asarray(mask, dtype=jnp.int32)
    k = int(mask.shape[0])
    k_pad = _round_up(k, 128)  # lane-dense output width (full-width vst)
    x_dtype = jnp.dtype(x_dtype)
    if x_dtype in (jnp.dtype(jnp.float32), jnp.dtype(jnp.bfloat16)):
        sel_dtype = jnp.bfloat16  # 0/1 exact in bf16; halves resident S VMEM for f32
    else:
        sel_dtype = x_dtype
    sel = jnp.zeros((num_classes, k_pad), dtype=sel_dtype)
    sel = sel.at[mask, jnp.arange(k, dtype=jnp.int32)].set(1)
    return sel, k


def imagenet_x_mask(x, sel, k):
    """Pallas equivalent of `x[:, mask]` given the precomputed selection matrix."""
    b, c = x.shape
    k_pad = sel.shape[1]
    tb = _pick_batch_tile(b, c, k_pad, x.dtype)

    kernel = (
        _select_kernel_f32_x3
        if jnp.dtype(x.dtype) == jnp.dtype(jnp.float32)
        else _select_kernel_direct
    )

    out = pl.pallas_call(
        kernel,
        out_shape=jax.ShapeDtypeStruct((b, k_pad), x.dtype),
        grid_spec=pltpu.PrefetchScalarGridSpec(
            num_scalar_prefetch=0,
            grid=(pl.cdiv(b, tb),),  # ragged last batch block masked by Pallas
            in_specs=[
                pl.BlockSpec((tb, c), lambda i: (i, 0)),      # streaming x tile
                pl.BlockSpec((c, k_pad), lambda i: (0, 0)),   # resident selection matrix
            ],
            out_specs=pl.BlockSpec((tb, k_pad), lambda i: (i, 0)),
        ),
        compiler_params=pltpu.CompilerParams(
            dimension_semantics=("parallel",),  # megacore split on v7x
            # no vmem_limit override: tile budget fits the default scoped limits
        ),
    )(x, sel)

    # Batch axis already exact (no pad); only trim the lane-padding columns.
    # TODO(synk): if the consumer can take the (b, K_pad) slab, drop this slice too.
    return out if k_pad == k else out[:, :k]


class ImageNetXMaskingLayer:
    """JAX/Pallas port of the PyTorch ImageNetXMaskingLayer (y = x[:, mask])."""

    def __init__(self, mask):
        # No trainable parameters; `mask` is a static list/array of class
        # indices (e.g. the ImageNet-R / ImageNet-X subset).
        self.mask = jnp.asarray(mask, dtype=jnp.int32)
        self._sel_cache = {}  # (num_classes, dtype name) -> (selection matrix, K)

    def __call__(self, x):
        _, c = x.shape
        key = (c, jnp.dtype(x.dtype).name)
        if key not in self._sel_cache:
            self._sel_cache[key] = _build_selection_matrix(self.mask, c, x.dtype)
        sel, k = self._sel_cache[key]
        return imagenet_x_mask(x, sel, k)


if __name__ == "__main__":
    key = jax.random.PRNGKey(0)

    # Small shapes consistent with the forward: x is (batch, num_classes)
    # logits; mask selects a deterministic subset of classes.
    B, C = 4, 32
    x = jax.random.normal(key, (B, C), dtype=jnp.float32)
    mask = jnp.array([1, 3, 5, 7, 11, 13, 17, 30], dtype=jnp.int32)

    layer = ImageNetXMaskingLayer(mask)

    # f32 path (manual X3 split).
    out = jax.block_until_ready(layer(x))
    ref = x[:, mask]
    assert out.shape == (B, int(mask.shape[0])), out.shape
    assert out.dtype == x.dtype
    assert jnp.allclose(out, ref, rtol=1e-6, atol=1e-6), "f32 mismatch vs reference gather"

    # bf16 path (single default-precision pass; x*1 round-trips exactly).
    xb = x.astype(jnp.bfloat16)
    outb = jax.block_until_ready(layer(xb))
    refb = xb[:, mask]
    assert outb.shape == refb.shape and outb.dtype == jnp.bfloat16
    assert jnp.allclose(outb.astype(jnp.float32), refb.astype(jnp.float32)), \
        "bf16 mismatch vs reference gather"

    print("KERNEL_OK")
</pallas_src>

<mosaic_0001>
module attributes {stable_mosaic.version = 11 : i64} {
  func.func @_select_kernel_f32_x3(%arg0: i32, %arg1: memref<8x32xf32, #tpu.memory_space<vmem>>, %arg2: memref<32x128xbf16, #tpu.memory_space<vmem>>, %arg3: memref<8x128xf32, #tpu.memory_space<vmem>>) attributes {dimension_semantics = [#tpu.dimension_semantics<parallel>], iteration_bounds = array<i64: 1>, scalar_prefetch = 0 : i64, scratch_operands = 0 : i64, tpu.core_type = #tpu.core_type<tc>, window_params = [{transform_indices = @transform_0, window_bounds = array<i64: 8, 32>}, {pipeline_mode = #tpu.pipeline_mode<synchronous>, transform_indices = @transform_1, window_bounds = array<i64: 32, 128>}, {transform_indices = @transform_2, window_bounds = array<i64: 8, 128>}]} {
    %c0 = arith.constant 0 : index
    %c0_0 = arith.constant 0 : index
    %0 = vector.load %arg1[%c0, %c0_0] : memref<8x32xf32, #tpu.memory_space<vmem>>, vector<8x32xf32>
    %c0_1 = arith.constant 0 : index
    %c0_2 = arith.constant 0 : index
    %1 = vector.load %arg2[%c0_1, %c0_2] : memref<32x128xbf16, #tpu.memory_space<vmem>>, vector<32x128xbf16>
    %2 = arith.truncf %0 : vector<8x32xf32> to vector<8x32xbf16>
    %3 = arith.extf %2 : vector<8x32xbf16> to vector<8x32xf32>
    %4 = arith.subf %0, %3 : vector<8x32xf32>
    %5 = arith.truncf %4 : vector<8x32xf32> to vector<8x32xbf16>
    %6 = arith.extf %5 : vector<8x32xbf16> to vector<8x32xf32>
    %7 = arith.subf %4, %6 : vector<8x32xf32>
    %8 = arith.truncf %7 : vector<8x32xf32> to vector<8x32xbf16>
    %cst = arith.constant dense<0.000000e+00> : vector<8x128xf32>
    %9 = tpu.matmul %2, %1, %cst {dimension_numbers = #tpu.dot_dimension_numbers<[1], [0], [0], [1], [0, 0, 1, 1], [], []>} : vector<8x32xbf16>, vector<32x128xbf16>, vector<8x128xf32> -> vector<8x128xf32>
    %cst_3 = arith.constant dense<0.000000e+00> : vector<8x128xf32>
    %10 = tpu.matmul %5, %1, %cst_3 {dimension_numbers = #tpu.dot_dimension_numbers<[1], [0], [0], [1], [0, 0, 1, 1], [], []>} : vector<8x32xbf16>, vector<32x128xbf16>, vector<8x128xf32> -> vector<8x128xf32>
    %11 = arith.addf %9, %10 : vector<8x128xf32>
    %cst_4 = arith.constant dense<0.000000e+00> : vector<8x128xf32>
    %12 = tpu.matmul %8, %1, %cst_4 {dimension_numbers = #tpu.dot_dimension_numbers<[1], [0], [0], [1], [0, 0, 1, 1], [], []>} : vector<8x32xbf16>, vector<32x128xbf16>, vector<8x128xf32> -> vector<8x128xf32>
    %13 = arith.addf %11, %12 : vector<8x128xf32>
    %c0_5 = arith.constant 0 : index
    %c0_6 = arith.constant 0 : index
    %14 = vector.load %arg3[%c0_5, %c0_6] : memref<8x128xf32, #tpu.memory_space<vmem>>, vector<8x128xf32>
    tpu.vector_store %arg3[%c0_5, %c0_6], %13 {strides = array<i32>} : memref<8x128xf32, #tpu.memory_space<vmem>>, vector<8x128xf32>,
    return
  }
  func.func @transform_0(%arg0: i32) -> (i32, i32) {
    %c0_i32 = arith.constant 0 : i32
    %c0_i32_0 = arith.constant 0 : i32
    return %arg0, %c0_i32 : i32, i32
  }
  func.func @transform_1(%arg0: i32) -> (i32, i32) {
    %c0_i32 = arith.constant 0 : i32
    %c0_i32_0 = arith.constant 0 : i32
    %c0_i32_1 = arith.constant 0 : i32
    return %c0_i32, %c0_i32_0 : i32, i32
  }
  func.func @transform_2(%arg0: i32) -> (i32, i32) {
    %c0_i32 = arith.constant 0 : i32
    %c0_i32_0 = arith.constant 0 : i32
    return %arg0, %c0_i32 : i32, i32
  }
}

</mosaic_0001>

<llo_original>
// kernel: tpu_custom_call.1
$region0: #{tpu_custom_call.1}
  #allocation0 [shape = 'u32[]', space=smem, size = 0x4, offset = 0x4, fixed_abs, tag = 'smem constant byte address 0x4 - core index']
  #allocation1 [shape = 'u32[144,128]{1,0:T(1,128)}', space=vmem, size = 0x12000, scoped, tag = 'internal scratch']
  %s0 = inlined_call_operand.hbm [shape: f32[4,32], index: 0, kind: input, shape index: {}]
  %s1 = inlined_call_operand.hbm [shape: bf16[32,128], index: 1, kind: input, shape index: {}]
  %s2 = inlined_call_operand.hbm [shape: f32[4,128], index: 2, kind: output, shape index: {}]
  %s3 = sld [smem:[#allocation0]]
  $region26: #{tpu_custom_call.1} parent=0
    _
  %s5 = ssub.s32 1, %s3
  %s6 = scalar_select 0, %s5, %s3
  $region1: #{tpu_custom_call.1} parent=0
    #allocation2 [shape = 'u8[4096]{0}', space=vmem, size = 0x1000, scoped, tag = 'input window, operand 0, single buffered']
    #allocation3 [shape = 's32[1]{0}', space=sflag, size = 0x4, scoped, tag = 'scoped memory for tpu_custom_call.1']
    #allocation4 [shape = 's32[1]{0}', space=sflag, size = 0x4, scoped, tag = 'scoped memory for tpu_custom_call.1']
    #allocation5 [shape = 'u8[8192]{0}', space=vmem, size = 0x2000, scoped, tag = 'input window, operand 1, single buffered']
    #allocation6 [shape = 's32[1]{0}', space=sflag, size = 0x4, scoped, tag = 'scoped memory for tpu_custom_call.1']
    #allocation7 [shape = 'u8[4096]{0}', space=vmem, size = 0x1000, scoped, tag = 'output window, operand 0, single buffered']
    %7 = vsyncpa [#allocation3], 0
    %8 = vsyncpa [#allocation6], 0
    %9 = vsyncpa [#allocation4], 0
    // Predicated region
    $region2: #{tpu_custom_call.1} parent=1 // pred_check
      _
    $region3: #{tpu_custom_call.1} parent=1 // pred_check_branch
      %11 = sbr.rel (0) target = $region5
    $region4: #{tpu_custom_call.1} parent=1 // pred_region
      %s13 = ssub.s32 128, 64
      %14 = vsyncadd [#allocation3], %s13
      %s15 = sshll.u32 [#allocation2], 4
      %s16 = int_to_ptr.vmem [resolvable:$true] %s15
      %21 = dma.hbm_to_vmem [thread:$0]  %s0, 64, %s16, [#allocation3], 64, 64, 4
    $region5: #{tpu_custom_call.1} parent=1 // pred_fallthru
      _
    // Predicated region
    $region6: #{tpu_custom_call.1} parent=1 // pred_check
      _
    $region7: #{tpu_custom_call.1} parent=1 // pred_check_branch
      %23 = sbr.rel (0) target = $region9
    $region8: #{tpu_custom_call.1} parent=1 // pred_region
      %s25 = ssub.s32 256, 256
      %26 = vsyncadd [#allocation6], %s25
      %s27 = sshll.u32 [#allocation5], 4
      %s28 = int_to_ptr.vmem [resolvable:$true] %s27
      %33 = dma.hbm_to_vmem [thread:$0]  %s1, 256, %s28, [#allocation6], 64, 64, 4
    $region9: #{tpu_custom_call.1} parent=1 // pred_fallthru
      _
    // Predicated region
    $region10: #{tpu_custom_call.1} parent=1 // pred_check
      _
    $region11: #{tpu_custom_call.1} parent=1 // pred_check_branch
      %35 = sbr.rel (0) target = $region13
    $region12: #{tpu_custom_call.1} parent=1 // pred_region
      %36 = dma.done [#allocation3], 128
    $region13: #{tpu_custom_call.1} parent=1 // pred_fallthru
      _
    // Predicated region
    $region14: #{tpu_custom_call.1} parent=1 // pred_check
      _
    $region15: #{tpu_custom_call.1} parent=1 // pred_check_branch
      %38 = sbr.rel (0) target = $region17
    $region16: #{tpu_custom_call.1} parent=1 // pred_region
      %39 = dma.done [#allocation6], 256
    $region17: #{tpu_custom_call.1} parent=1 // pred_fallthru
      _
    %v41 = vld [vmem:[#allocation2] sm:$0xff]
    %v42 = vld [vmem:[#allocation5] sm:$0xf]
    %v43 = vld [vmem:[#allocation5 + $0x4] sm:$0xf]
    %v44 = vld [vmem:[#allocation5 + $0x8] sm:$0xf]
    %v45 = vld [vmem:[#allocation5 + $0xc] sm:$0xf]
    %v46 = vpack.c.bf16 %v41, %v41
    %v47 = vunpack.c.l.bf16 %v46
    %v48 = vsub.f32 %v41, %v47
    %v49 = vpack.c.bf16 %v48, %v48
    %v50 = vunpack.c.l.bf16 %v49
    %v51 = vsub.f32 %v48, %v50
    %v52 = vpack.c.bf16 %v51, %v51
    %v57 = vunpack.c.l.b16 %v42
    %v58 = vunpack.c.l.b16 %v43
    %v59 = vunpack.c.l.b16 %v44
    %v60 = vunpack.c.l.b16 %v45
    %v61 = vpack.c.b16 %v58, %v57
    %v62 = vpack.c.b16 %v60, %v59
    %vm65 = vcmask 261120
    %v67 = vsel %vm65, %v49, 0
    %69 = vmatprep.subr.bf16.mxu0 0
    %70 = vmatpush1.bf16.msra.mxu0 %v61
    %71 = vmatprep.subr.bf16.mxu0 0
    %72 = vmatpush1.bf16.msra.mxu0 %v62
    %73 = vmatprep.subr.bf16.mxu0 0
    %74 = vmatpush1.bf16.msra.mxu0 0
    %75 = vmatprep.subr.bf16.mxu0 0
    %76 = vmatpush1.bf16.msra.mxu0 0
    %77 = vmatprep.subr.bf16.mxu0 0
    %78 = vmatpush1.bf16.msra.mxu0 0
    %79 = vmatprep.subr.bf16.mxu0 0
    %80 = vmatpush1.bf16.msra.mxu0 0
    %81 = vmatprep.subr.bf16.mxu0 0
    %82 = vmatpush1.bf16.msra.mxu0 0
    %83 = vmatprep.subr.bf16.mxu0 0
    %84 = vmatpush1.bf16.msra.mxu0 0
    %85 = vmatprep.subr.bf16.mxu0 0
    %86 = vmatpush1.bf16.msra.mxu0 0
    %87 = vmatprep.subr.bf16.mxu0 0
    %88 = vmatpush1.bf16.msra.mxu0 0
    %89 = vmatprep.subr.bf16.mxu0 0
    %90 = vmatpush1.bf16.msra.mxu0 0
    %91 = vmatprep.subr.bf16.mxu0 0
    %92 = vmatpush1.bf16.msra.mxu0 0
    %93 = vmatprep.subr.bf16.mxu0 0
    %94 = vmatpush1.bf16.msra.mxu0 0
    %95 = vmatprep.subr.bf16.mxu0 0
    %96 = vmatpush1.bf16.msra.mxu0 0
    %97 = vmatprep.subr.bf16.mxu0 0
    %98 = vmatpush1.bf16.msra.mxu0 0
    %99 = vmatprep.subr.bf16.mxu0 0
    %100 = vmatpush1.bf16.msra.mxu0 0
    %101 = vmatprep.mubr.bf16.mxu0 0
    %102 = vmatmul.mubr.bf16.gmra.mrb[0].mxu0 %v67
    %v103 = vpop.f32.mrb[0].mxu0
    %v104 = vadd.f32 0.0, %v103
    %v105 = vpop.f32.mrb[0].mxu0
    %v106 = vpop.f32.mrb[0].mxu0
    %v107 = vpop.f32.mrb[0].mxu0
    %108 = vdwg.mxu0
    %v110 = vsel %vm65, %v46, 0
    %112 = vmatprep.subr.bf16.mxu0 0
    %113 = vmatpush1.bf16.msra.mxu0 %v61
    %114 = vmatprep.subr.bf16.mxu0 0
    %115 = vmatpush1.bf16.msra.mxu0 %v62
    %116 = vmatprep.subr.bf16.mxu0 0
    %117 = vmatpush1.bf16.msra.mxu0 0
    %118 = vmatprep.subr.bf16.mxu0 0
    %119 = vmatpush1.bf16.msra.mxu0 0
    %120 = vmatprep.subr.bf16.mxu0 0
    %121 = vmatpush1.bf16.msra.mxu0 0
    %122 = vmatprep.subr.bf16.mxu0 0
    %123 = vmatpush1.bf16.msra.mxu0 0
    %124 = vmatprep.subr.bf16.mxu0 0
    %125 = vmatpush1.bf16.msra.mxu0 0
    %126 = vmatprep.subr.bf16.mxu0 0
    %127 = vmatpush1.bf16.msra.mxu0 0
    %128 = vmatprep.subr.bf16.mxu0 0
    %129 = vmatpush1.bf16.msra.mxu0 0
    %130 = vmatprep.subr.bf16.mxu0 0
    %131 = vmatpush1.bf16.msra.mxu0 0
    %132 = vmatprep.subr.bf16.mxu0 0
    %133 = vmatpush1.bf16.msra.mxu0 0
    %134 = vmatprep.subr.bf16.mxu0 0
    %135 = vmatpush1.bf16.msra.mxu0 0
    %136 = vmatprep.subr.bf16.mxu0 0
    %137 = vmatpush1.bf16.msra.mxu0 0
    %138 = vmatprep.subr.bf16.mxu0 0
    %139 = vmatpush1.bf16.msra.mxu0 0
    %140 = vmatprep.subr.bf16.mxu0 0
    %141 = vmatpush1.bf16.msra.mxu0 0
    %142 = vmatprep.subr.bf16.mxu0 0
    %143 = vmatpush1.bf16.msra.mxu0 0
    %144 = vmatprep.mubr.bf16.mxu0 0
    %145 = vmatmul.mubr.bf16.gmra.mrb[0].mxu0 %v110
    %v146 = vpop.f32.mrb[0].mxu0
    %v147 = vadd.f32 %v104, %v146
    %v148 = vpop.f32.mrb[0].mxu0
    %v149 = vpop.f32.mrb[0].mxu0
    %v150 = vpop.f32.mrb[0].mxu0
    %151 = vdwg.mxu0
    %v153 = vsel %vm65, %v52, 0
    %155 = vmatprep.subr.bf16.mxu0 0
    %156 = vmatpush1.bf16.msra.mxu0 %v61
    %157 = vmatprep.subr.bf16.mxu0 0
    %158 = vmatpush1.bf16.msra.mxu0 %v62
    %159 = vmatprep.subr.bf16.mxu0 0
    %160 = vmatpush1.bf16.msra.mxu0 0
    %161 = vmatprep.subr.bf16.mxu0 0
    %162 = vmatpush1.bf16.msra.mxu0 0
    %163 = vmatprep.subr.bf16.mxu0 0
    %164 = vmatpush1.bf16.msra.mxu0 0
    %165 = vmatprep.subr.bf16.mxu0 0
    %166 = vmatpush1.bf16.msra.mxu0 0
    %167 = vmatprep.subr.bf16.mxu0 0
    %168 = vmatpush1.bf16.msra.mxu0 0
    %169 = vmatprep.subr.bf16.mxu0 0
    %170 = vmatpush1.bf16.msra.mxu0 0
    %171 = vmatprep.subr.bf16.mxu0 0
    %172 = vmatpush1.bf16.msra.mxu0 0
    %173 = vmatprep.subr.bf16.mxu0 0
    %174 = vmatpush1.bf16.msra.mxu0 0
    %175 = vmatprep.subr.bf16.mxu0 0
    %176 = vmatpush1.bf16.msra.mxu0 0
    %177 = vmatprep.subr.bf16.mxu0 0
    %178 = vmatpush1.bf16.msra.mxu0 0
    %179 = vmatprep.subr.bf16.mxu0 0
    %180 = vmatpush1.bf16.msra.mxu0 0
    %181 = vmatprep.subr.bf16.mxu0 0
    %182 = vmatpush1.bf16.msra.mxu0 0
    %183 = vmatprep.subr.bf16.mxu0 0
    %184 = vmatpush1.bf16.msra.mxu0 0
    %185 = vmatprep.subr.bf16.mxu0 0
    %186 = vmatpush1.bf16.msra.mxu0 0
    %187 = vmatprep.mubr.bf16.mxu0 0
    %188 = vmatmul.mubr.bf16.gmra.mrb[0].mxu0 %v153
    %v189 = vpop.f32.mrb[0].mxu0
    %v190 = vadd.f32 0.0, %v189
    %v191 = vpop.f32.mrb[0].mxu0
    %v192 = vpop.f32.mrb[0].mxu0
    %v193 = vpop.f32.mrb[0].mxu0
    %194 = vdwg.mxu0
    %v195 = vadd.f32 %v147, %v190
    %196 = vst [vmem:[#allocation7] sm:$0xff] %v195
    // Predicated region
    $region18: #{tpu_custom_call.1} parent=1 // pred_check
      _
    $region19: #{tpu_custom_call.1} parent=1 // pred_check_branch
      %198 = sbr.rel (0) target = $region21
    $region20: #{tpu_custom_call.1} parent=1 // pred_region
      %s200 = ssub.s32 128, 64
      %201 = vsyncadd [#allocation4], %s200
      %s202 = sshll.u32 [#allocation7], 4
      %s203 = int_to_ptr.vmem [resolvable:$true] %s202
      %208 = dma.vmem_to_hbm [thread:$0]  %s203, 64, %s2, [#allocation4], 64, 64, 4
    $region21: #{tpu_custom_call.1} parent=1 // pred_fallthru
      _
    // Predicated region
    $region22: #{tpu_custom_call.1} parent=1 // pred_check
      _
    $region23: #{tpu_custom_call.1} parent=1 // pred_check_branch
      %210 = sbr.rel (0) target = $region25
    $region24: #{tpu_custom_call.1} parent=1 // pred_region
      %211 = dma.done [#allocation4], 128
    $region25: #{tpu_custom_call.1} parent=1 // pred_fallthru
      _
    %212 = vsyncpa [#allocation3], 1
    %213 = vsyncpa [#allocation6], 1
    %214 = vsyncpa [#allocation4], 1

</llo_original>
